<compile_context>
chip_gen: v7x
topology: tpu7x:2x2x1
jax: 0.10.0
libtpu: 0.0.40
codegen_flags: <defaults>
</compile_context>

<pallas_src>
import jax
import jax.numpy as jnp
from jax import lax
from jax.experimental import pallas as pl
from jax.experimental.pallas import tpu as pltpu


def _round_up(x, m):
    return (x + m - 1) // m * m


def _gate_slab_layout(input_dim, hidden_dim):
    """Row offsets of the packed gate slab: [W_ih | pad | W_hh | pad | bias]."""
    whh_off = _round_up(input_dim, 8)
    b_off = _round_up(whh_off + hidden_dim, 8)
    n_rows = _round_up(b_off + 1, 8)
    return whh_off, b_off, n_rows


def text_lstm_kernel(x_ref, gslab_ref, dslab_ref, out_ref, gx_ref):
    """Whole TextLSTM forward for one call.

    x_ref    : (B, T, D)        batch-major input (no wrapper transpose)
    gslab_ref: (n_rows, 4H)     packed [W_ih (D rows) | W_hh (H rows) | gate bias (1 row)]
    dslab_ref: (2H+1, n_class)  packed fused decoder [W1a@W2 | W1b@W2 | b1@W2 + b2]
    out_ref  : (B, n_class)
    gx_ref   : (B, T, 4H)       VMEM scratch holding the hoisted input projection
    """
    B, T, D = x_ref.shape
    G = gslab_ref.shape[1]
    H = G // 4
    whh_off, b_off, _ = _gate_slab_layout(D, H)

    # Static slices of the packed parameter slab (zero-cost ref views -> single loads).
    wih = gslab_ref[0:D, :]                      # (D, 4H)
    whh = gslab_ref[whh_off:whh_off + H, :]      # (H, 4H)
    b = gslab_ref[b_off:b_off + 1, :]            # (1, 4H)

    # --- Hoisted input projection: one MXU matmul for all timesteps + folded bias ---
    x2d = x_ref[...].reshape(B * T, D)           # layout-preserving merge
    gx = jnp.dot(x2d, wih, preferred_element_type=jnp.float32) + b   # (B*T, 4H)
    gx_ref[...] = gx.reshape(B, T, G)            # park in VMEM; per-step reads are vlds

    def cell(gates, c_prev):
        # Full-width activations (one sigmoid + one tanh over the 4H=128-lane vreg).
        s = jax.nn.sigmoid(gates)
        th = jnp.tanh(gates)
        i = s[:, 0 * H:1 * H]
        f = s[:, 1 * H:2 * H]
        g = th[:, 2 * H:3 * H]
        o = s[:, 3 * H:4 * H]
        c_new = f * c_prev + i * g
        h_new = o * jnp.tanh(c_new)
        return h_new, c_new

    # --- Peeled t = 0 step: h = c = 0, so skip h @ W_hh and the f*c term ---
    gates0 = gx_ref[:, 0, :]
    s0 = jax.nn.sigmoid(gates0)
    th0 = jnp.tanh(gates0)
    c = s0[:, 0 * H:1 * H] * th0[:, 2 * H:3 * H]          # c1 = i * g
    h = s0[:, 3 * H:4 * H] * jnp.tanh(c)                  # h1 = o * tanh(c1)
    h_first = h                                           # states[0]

    # --- Remaining recurrence: only h @ W_hh sits on the serial path ---
    for t in range(1, T):
        gates = gx_ref[:, t, :] + jnp.dot(h, whh, preferred_element_type=jnp.float32)
        h, c = cell(gates, c)
    h_last = h                                            # states[-1]

    # --- Fused decoder2(decoder1(.)) — single MXU level, no concat ---
    wa = dslab_ref[0:H, :]                # (H, n_class) acts on states[0]
    wb = dslab_ref[H:2 * H, :]            # (H, n_class) acts on states[-1]
    bc = dslab_ref[2 * H:2 * H + 1, :]    # (1, n_class) fused bias
    out = (jnp.dot(h_first, wa, preferred_element_type=jnp.float32)
           + jnp.dot(h_last, wb, preferred_element_type=jnp.float32)
           + bc)
    out_ref[...] = out.astype(out_ref.dtype)


def text_lstm_forward(x, gate_slab, dec_slab):
    """x: (batch, seq, 50) -> logits (batch, n_class)."""
    B, T, D = x.shape
    G = gate_slab.shape[1]
    H = G // 4
    n_class = dec_slab.shape[1]

    vmem = pl.BlockSpec(memory_space=pltpu.MemorySpace.VMEM)

    flops = (2 * B * T * D * G                 # hoisted input projection
             + 2 * B * (T - 1) * H * G         # recurrent matmuls (t=0 peeled)
             + 2 * B * 2 * H * n_class)        # fused decoder (two H x n_class dots)
    transcendentals = B * T * (2 * G + H)
    bytes_accessed = 4 * (B * T * D + gate_slab.size + dec_slab.size + B * n_class)
    cost = pl.CostEstimate(flops=flops, transcendentals=transcendentals,
                           bytes_accessed=bytes_accessed)

    return pl.pallas_call(
        text_lstm_kernel,
        out_shape=jax.ShapeDtypeStruct((B, n_class), jnp.float32),
        in_specs=[vmem, vmem, vmem],
        out_specs=vmem,
        scratch_shapes=[pltpu.VMEM((B, T, G), jnp.float32)],
        cost_estimate=cost,
    )(x, gate_slab, dec_slab)


def init_params(key, input_dim=50, hidden_dim=32, n_class=2):
    """PyTorch-layout parameters with PyTorch-style U(-1/sqrt(H), 1/sqrt(H)) init."""
    ks = jax.random.split(key, 8)
    s = 1.0 / jnp.sqrt(hidden_dim)

    def u(k, shape):
        return jax.random.uniform(k, shape, jnp.float32, minval=-s, maxval=s)

    return {
        "weight_ih": u(ks[0], (4 * hidden_dim, input_dim)),    # LSTM weight_ih_l0
        "weight_hh": u(ks[1], (4 * hidden_dim, hidden_dim)),   # LSTM weight_hh_l0
        "bias_ih": u(ks[2], (4 * hidden_dim,)),
        "bias_hh": u(ks[3], (4 * hidden_dim,)),
        "w1": u(ks[4], (hidden_dim, 2 * hidden_dim)),           # decoder1.weight
        "b1": u(ks[5], (hidden_dim,)),
        "w2": u(ks[6], (n_class, hidden_dim)),                  # decoder2.weight
        "b2": u(ks[7], (n_class,)),
    }


def pack_params(raw):
    """Pack PyTorch-layout params into the two lane-dense kernel slabs."""
    G, D = raw["weight_ih"].shape
    H = G // 4
    n_class = raw["w2"].shape[0]
    whh_off, b_off, n_rows = _gate_slab_layout(D, H)

    gate_slab = jnp.zeros((n_rows, G), jnp.float32)
    gate_slab = gate_slab.at[0:D, :].set(raw["weight_ih"].T)
    gate_slab = gate_slab.at[whh_off:whh_off + H, :].set(raw["weight_hh"].T)
    gate_slab = gate_slab.at[b_off, :].set(raw["bias_ih"] + raw["bias_hh"])

    # Fuse decoder1 and decoder2 offline (no nonlinearity between them in the module).
    w1_t = raw["w1"].T                         # (2H, H)
    w2_t = raw["w2"].T                         # (H, n_class)
    wa = w1_t[:H, :] @ w2_t                    # acts on states[0]
    wb = w1_t[H:, :] @ w2_t                    # acts on states[-1]
    bc = raw["b1"] @ w2_t + raw["b2"]          # fused bias
    dec_slab = jnp.concatenate([wa, wb, bc.reshape(1, n_class)], axis=0)  # (2H+1, nc)

    return gate_slab, dec_slab


def text_lstm_reference(x, raw):
    """Pure-JAX reference of the *unfused* module (nn.LSTM + decoder1 + decoder2)."""
    xs = jnp.transpose(x, (1, 0, 2))           # input.permute([1, 0, 2])
    T, B, _ = xs.shape
    H = raw["weight_hh"].shape[1]
    wih, whh = raw["weight_ih"].T, raw["weight_hh"].T
    b = raw["bias_ih"] + raw["bias_hh"]

    def step(carry, x_t):
        h, c = carry
        gates = x_t @ wih + h @ whh + b
        i = jax.nn.sigmoid(gates[:, 0 * H:1 * H])
        f = jax.nn.sigmoid(gates[:, 1 * H:2 * H])
        g = jnp.tanh(gates[:, 2 * H:3 * H])
        o = jax.nn.sigmoid(gates[:, 3 * H:4 * H])
        c = f * c + i * g
        h = o * jnp.tanh(c)
        return (h, c), h

    h0 = jnp.zeros((B, H), jnp.float32)
    c0 = jnp.zeros((B, H), jnp.float32)
    _, states = lax.scan(step, (h0, c0), xs)
    encoding = jnp.concatenate([states[0], states[-1]], axis=1)   # torch.cat(..., dim=1)
    z1 = encoding @ raw["w1"].T + raw["b1"]                        # decoder1
    return z1 @ raw["w2"].T + raw["b2"]                            # decoder2


if __name__ == "__main__":
    key = jax.random.PRNGKey(0)
    k_x, k_p = jax.random.split(key)

    batch, seq, input_dim, hidden_dim = 2, 8, 50, 32
    x = jax.random.normal(k_x, (batch, seq, input_dim), jnp.float32)
    raw = init_params(k_p, input_dim=input_dim, hidden_dim=hidden_dim)
    gate_slab, dec_slab = pack_params(raw)

    out = text_lstm_forward(x, gate_slab, dec_slab)
    out = jax.block_until_ready(out)

    ref = text_lstm_reference(x, raw)
    assert out.shape == (batch, 2)
    assert jnp.allclose(out, ref, rtol=1e-5, atol=1e-5), jnp.max(jnp.abs(out - ref))

    print("KERNEL_OK")
</pallas_src>

<mosaic_0001>
module attributes {stable_mosaic.version = 11 : i64} {
  func.func @text_lstm_kernel(%arg0: memref<2x8x50xf32, #tpu.memory_space<vmem>>, %arg1: memref<96x128xf32, #tpu.memory_space<vmem>>, %arg2: memref<65x2xf32, #tpu.memory_space<vmem>>, %arg3: memref<2x2xf32, #tpu.memory_space<vmem>>, %arg4: memref<2x8x128xf32, #tpu.memory_space<vmem>>) attributes {dimension_semantics = [], scalar_prefetch = 0 : i64, scratch_operands = 1 : i64, tpu.core_type = #tpu.core_type<tc>} {
    %c0 = arith.constant 0 : index
    %c0_0 = arith.constant 0 : index
    %0 = vector.load %arg1[%c0, %c0_0] : memref<96x128xf32, #tpu.memory_space<vmem>>, vector<50x128xf32>
    %c56 = arith.constant 56 : index
    %c0_1 = arith.constant 0 : index
    %1 = vector.load %arg1[%c56, %c0_1] : memref<96x128xf32, #tpu.memory_space<vmem>>, vector<32x128xf32>
    %c88 = arith.constant 88 : index
    %c0_2 = arith.constant 0 : index
    %2 = vector.load %arg1[%c88, %c0_2] : memref<96x128xf32, #tpu.memory_space<vmem>>, vector<1x128xf32>
    %c0_3 = arith.constant 0 : index
    %c0_4 = arith.constant 0 : index
    %c0_5 = arith.constant 0 : index
    %3 = vector.load %arg0[%c0_3, %c0_4, %c0_5] : memref<2x8x50xf32, #tpu.memory_space<vmem>>, vector<2x8x50xf32>
    %4 = vector.shape_cast %3 : vector<2x8x50xf32> to vector<16x50xf32>
    %cst = arith.constant dense<0.000000e+00> : vector<16x128xf32>
    %5 = tpu.matmul %4, %0, %cst {dimension_numbers = #tpu.dot_dimension_numbers<[1], [0], [0], [1], [0, 0, 1, 1], [], []>} : vector<16x50xf32>, vector<50x128xf32>, vector<16x128xf32> -> vector<16x128xf32>
    %6 = vector.broadcast %2 : vector<1x128xf32> to vector<16x128xf32>
    %7 = arith.addf %5, %6 : vector<16x128xf32>
    %8 = vector.shape_cast %7 : vector<16x128xf32> to vector<2x8x128xf32>
    %c0_6 = arith.constant 0 : index
    %c0_7 = arith.constant 0 : index
    %c0_8 = arith.constant 0 : index
    %9 = vector.load %arg4[%c0_6, %c0_7, %c0_8] : memref<2x8x128xf32, #tpu.memory_space<vmem>>, vector<2x8x128xf32>
    tpu.vector_store %arg4[%c0_6, %c0_7, %c0_8], %8 {strides = array<i32>} : memref<2x8x128xf32, #tpu.memory_space<vmem>>, vector<2x8x128xf32>,
    %c0_9 = arith.constant 0 : index
    %c0_10 = arith.constant 0 : index
    %c0_11 = arith.constant 0 : index
    %10 = vector.load %arg4[%c0_9, %c0_10, %c0_11] : memref<2x8x128xf32, #tpu.memory_space<vmem>>, vector<2x1x128xf32>
    %11 = vector.shape_cast %10 : vector<2x1x128xf32> to vector<2x128xf32>
    %12 = arith.negf %11 : vector<2x128xf32>
    %13 = math.exp %12 : vector<2x128xf32>
    %cst_12 = arith.constant 1.000000e+00 : f32
    %14 = vector.broadcast %cst_12 : f32 to vector<2x128xf32>
    %15 = arith.addf %14, %13 : vector<2x128xf32>
    %16 = arith.divf %14, %15 : vector<2x128xf32>
    %17 = math.tanh %11 : vector<2x128xf32>
    %18 = vector.extract_strided_slice %16 {offsets = [0, 0], sizes = [2, 32], strides = [1, 1]} : vector<2x128xf32> to vector<2x32xf32>
    %19 = vector.extract_strided_slice %17 {offsets = [0, 64], sizes = [2, 32], strides = [1, 1]} : vector<2x128xf32> to vector<2x32xf32>
    %20 = arith.mulf %18, %19 : vector<2x32xf32>
    %21 = vector.extract_strided_slice %16 {offsets = [0, 96], sizes = [2, 32], strides = [1, 1]} : vector<2x128xf32> to vector<2x32xf32>
    %22 = math.tanh %20 : vector<2x32xf32>
    %23 = arith.mulf %21, %22 : vector<2x32xf32>
    %c0_13 = arith.constant 0 : index
    %c1 = arith.constant 1 : index
    %c0_14 = arith.constant 0 : index
    %24 = vector.load %arg4[%c0_13, %c1, %c0_14] : memref<2x8x128xf32, #tpu.memory_space<vmem>>, vector<2x1x128xf32>
    %25 = vector.shape_cast %24 : vector<2x1x128xf32> to vector<2x128xf32>
    %cst_15 = arith.constant dense<0.000000e+00> : vector<2x128xf32>
    %26 = tpu.matmul %23, %1, %cst_15 {dimension_numbers = #tpu.dot_dimension_numbers<[1], [0], [0], [1], [0, 0, 1, 1], [], []>} : vector<2x32xf32>, vector<32x128xf32>, vector<2x128xf32> -> vector<2x128xf32>
    %27 = arith.addf %25, %26 : vector<2x128xf32>
    %28 = arith.negf %27 : vector<2x128xf32>
    %29 = math.exp %28 : vector<2x128xf32>
    %cst_16 = arith.constant 1.000000e+00 : f32
    %30 = vector.broadcast %cst_16 : f32 to vector<2x128xf32>
    %31 = arith.addf %30, %29 : vector<2x128xf32>
    %32 = arith.divf %30, %31 : vector<2x128xf32>
    %33 = math.tanh %27 : vector<2x128xf32>
    %34 = vector.extract_strided_slice %32 {offsets = [0, 0], sizes = [2, 32], strides = [1, 1]} : vector<2x128xf32> to vector<2x32xf32>
    %35 = vector.extract_strided_slice %32 {offsets = [0, 32], sizes = [2, 32], strides = [1, 1]} : vector<2x128xf32> to vector<2x32xf32>
    %36 = vector.extract_strided_slice %33 {offsets = [0, 64], sizes = [2, 32], strides = [1, 1]} : vector<2x128xf32> to vector<2x32xf32>
    %37 = vector.extract_strided_slice %32 {offsets = [0, 96], sizes = [2, 32], strides = [1, 1]} : vector<2x128xf32> to vector<2x32xf32>
    %38 = arith.mulf %35, %20 : vector<2x32xf32>
    %39 = arith.mulf %34, %36 : vector<2x32xf32>
    %40 = arith.addf %38, %39 : vector<2x32xf32>
    %41 = math.tanh %40 : vector<2x32xf32>
    %42 = arith.mulf %37, %41 : vector<2x32xf32>
    %c0_17 = arith.constant 0 : index
    %c2 = arith.constant 2 : index
    %c0_18 = arith.constant 0 : index
    %43 = vector.load %arg4[%c0_17, %c2, %c0_18] : memref<2x8x128xf32, #tpu.memory_space<vmem>>, vector<2x1x128xf32>
    %44 = vector.shape_cast %43 : vector<2x1x128xf32> to vector<2x128xf32>
    %cst_19 = arith.constant dense<0.000000e+00> : vector<2x128xf32>
    %45 = tpu.matmul %42, %1, %cst_19 {dimension_numbers = #tpu.dot_dimension_numbers<[1], [0], [0], [1], [0, 0, 1, 1], [], []>} : vector<2x32xf32>, vector<32x128xf32>, vector<2x128xf32> -> vector<2x128xf32>
    %46 = arith.addf %44, %45 : vector<2x128xf32>
    %47 = arith.negf %46 : vector<2x128xf32>
    %48 = math.exp %47 : vector<2x128xf32>
    %cst_20 = arith.constant 1.000000e+00 : f32
    %49 = vector.broadcast %cst_20 : f32 to vector<2x128xf32>
    %50 = arith.addf %49, %48 : vector<2x128xf32>
    %51 = arith.divf %49, %50 : vector<2x128xf32>
    %52 = math.tanh %46 : vector<2x128xf32>
    %53 = vector.extract_strided_slice %51 {offsets = [0, 0], sizes = [2, 32], strides = [1, 1]} : vector<2x128xf32> to vector<2x32xf32>
    %54 = vector.extract_strided_slice %51 {offsets = [0, 32], sizes = [2, 32], strides = [1, 1]} : vector<2x128xf32> to vector<2x32xf32>
    %55 = vector.extract_strided_slice %52 {offsets = [0, 64], sizes = [2, 32], strides = [1, 1]} : vector<2x128xf32> to vector<2x32xf32>
    %56 = vector.extract_strided_slice %51 {offsets = [0, 96], sizes = [2, 32], strides = [1, 1]} : vector<2x128xf32> to vector<2x32xf32>
    %57 = arith.mulf %54, %40 : vector<2x32xf32>
    %58 = arith.mulf %53, %55 : vector<2x32xf32>
    %59 = arith.addf %57, %58 : vector<2x32xf32>
    %60 = math.tanh %59 : vector<2x32xf32>
    %61 = arith.mulf %56, %60 : vector<2x32xf32>
    %c0_21 = arith.constant 0 : index
    %c3 = arith.constant 3 : index
    %c0_22 = arith.constant 0 : index
    %62 = vector.load %arg4[%c0_21, %c3, %c0_22] : memref<2x8x128xf32, #tpu.memory_space<vmem>>, vector<2x1x128xf32>
    %63 = vector.shape_cast %62 : vector<2x1x128xf32> to vector<2x128xf32>
    %cst_23 = arith.constant dense<0.000000e+00> : vector<2x128xf32>
    %64 = tpu.matmul %61, %1, %cst_23 {dimension_numbers = #tpu.dot_dimension_numbers<[1], [0], [0], [1], [0, 0, 1, 1], [], []>} : vector<2x32xf32>, vector<32x128xf32>, vector<2x128xf32> -> vector<2x128xf32>
    %65 = arith.addf %63, %64 : vector<2x128xf32>
    %66 = arith.negf %65 : vector<2x128xf32>
    %67 = math.exp %66 : vector<2x128xf32>
    %cst_24 = arith.constant 1.000000e+00 : f32
    %68 = vector.broadcast %cst_24 : f32 to vector<2x128xf32>
    %69 = arith.addf %68, %67 : vector<2x128xf32>
    %70 = arith.divf %68, %69 : vector<2x128xf32>
    %71 = math.tanh %65 : vector<2x128xf32>
    %72 = vector.extract_strided_slice %70 {offsets = [0, 0], sizes = [2, 32], strides = [1, 1]} : vector<2x128xf32> to vector<2x32xf32>
    %73 = vector.extract_strided_slice %70 {offsets = [0, 32], sizes = [2, 32], strides = [1, 1]} : vector<2x128xf32> to vector<2x32xf32>
    %74 = vector.extract_strided_slice %71 {offsets = [0, 64], sizes = [2, 32], strides = [1, 1]} : vector<2x128xf32> to vector<2x32xf32>
    %75 = vector.extract_strided_slice %70 {offsets = [0, 96], sizes = [2, 32], strides = [1, 1]} : vector<2x128xf32> to vector<2x32xf32>
    %76 = arith.mulf %73, %59 : vector<2x32xf32>
    %77 = arith.mulf %72, %74 : vector<2x32xf32>
    %78 = arith.addf %76, %77 : vector<2x32xf32>
    %79 = math.tanh %78 : vector<2x32xf32>
    %80 = arith.mulf %75, %79 : vector<2x32xf32>
    %c0_25 = arith.constant 0 : index
    %c4 = arith.constant 4 : index
    %c0_26 = arith.constant 0 : index
    %81 = vector.load %arg4[%c0_25, %c4, %c0_26] : memref<2x8x128xf32, #tpu.memory_space<vmem>>, vector<2x1x128xf32>
    %82 = vector.shape_cast %81 : vector<2x1x128xf32> to vector<2x128xf32>
    %cst_27 = arith.constant dense<0.000000e+00> : vector<2x128xf32>
    %83 = tpu.matmul %80, %1, %cst_27 {dimension_numbers = #tpu.dot_dimension_numbers<[1], [0], [0], [1], [0, 0, 1, 1], [], []>} : vector<2x32xf32>, vector<32x128xf32>, vector<2x128xf32> -> vector<2x128xf32>
    %84 = arith.addf %82, %83 : vector<2x128xf32>
    %85 = arith.negf %84 : vector<2x128xf32>
    %86 = math.exp %85 : vector<2x128xf32>
    %cst_28 = arith.constant 1.000000e+00 : f32
    %87 = vector.broadcast %cst_28 : f32 to vector<2x128xf32>
    %88 = arith.addf %87, %86 : vector<2x128xf32>
    %89 = arith.divf %87, %88 : vector<2x128xf32>
    %90 = math.tanh %84 : vector<2x128xf32>
    %91 = vector.extract_strided_slice %89 {offsets = [0, 0], sizes = [2, 32], strides = [1, 1]} : vector<2x128xf32> to vector<2x32xf32>
    %92 = vector.extract_strided_slice %89 {offsets = [0, 32], sizes = [2, 32], strides = [1, 1]} : vector<2x128xf32> to vector<2x32xf32>
    %93 = vector.extract_strided_slice %90 {offsets = [0, 64], sizes = [2, 32], strides = [1, 1]} : vector<2x128xf32> to vector<2x32xf32>
    %94 = vector.extract_strided_slice %89 {offsets = [0, 96], sizes = [2, 32], strides = [1, 1]} : vector<2x128xf32> to vector<2x32xf32>
    %95 = arith.mulf %92, %78 : vector<2x32xf32>
    %96 = arith.mulf %91, %93 : vector<2x32xf32>
    %97 = arith.addf %95, %96 : vector<2x32xf32>
    %98 = math.tanh %97 : vector<2x32xf32>
    %99 = arith.mulf %94, %98 : vector<2x32xf32>
    %c0_29 = arith.constant 0 : index
    %c5 = arith.constant 5 : index
    %c0_30 = arith.constant 0 : index
    %100 = vector.load %arg4[%c0_29, %c5, %c0_30] : memref<2x8x128xf32, #tpu.memory_space<vmem>>, vector<2x1x128xf32>
    %101 = vector.shape_cast %100 : vector<2x1x128xf32> to vector<2x128xf32>
    %cst_31 = arith.constant dense<0.000000e+00> : vector<2x128xf32>
    %102 = tpu.matmul %99, %1, %cst_31 {dimension_numbers = #tpu.dot_dimension_numbers<[1], [0], [0], [1], [0, 0, 1, 1], [], []>} : vector<2x32xf32>, vector<32x128xf32>, vector<2x128xf32> -> vector<2x128xf32>
    %103 = arith.addf %101, %102 : vector<2x128xf32>
    %104 = arith.negf %103 : vector<2x128xf32>
    %105 = math.exp %104 : vector<2x128xf32>
    %cst_32 = arith.constant 1.000000e+00 : f32
    %106 = vector.broadcast %cst_32 : f32 to vector<2x128xf32>
    %107 = arith.addf %106, %105 : vector<2x128xf32>
    %108 = arith.divf %106, %107 : vector<2x128xf32>
    %109 = math.tanh %103 : vector<2x128xf32>
    %110 = vector.extract_strided_slice %108 {offsets = [0, 0], sizes = [2, 32], strides = [1, 1]} : vector<2x128xf32> to vector<2x32xf32>
    %111 = vector.extract_strided_slice %108 {offsets = [0, 32], sizes = [2, 32], strides = [1, 1]} : vector<2x128xf32> to vector<2x32xf32>
    %112 = vector.extract_strided_slice %109 {offsets = [0, 64], sizes = [2, 32], strides = [1, 1]} : vector<2x128xf32> to vector<2x32xf32>
    %113 = vector.extract_strided_slice %108 {offsets = [0, 96], sizes = [2, 32], strides = [1, 1]} : vector<2x128xf32> to vector<2x32xf32>
    %114 = arith.mulf %111, %97 : vector<2x32xf32>
    %115 = arith.mulf %110, %112 : vector<2x32xf32>
    %116 = arith.addf %114, %115 : vector<2x32xf32>
    %117 = math.tanh %116 : vector<2x32xf32>
    %118 = arith.mulf %113, %117 : vector<2x32xf32>
    %c0_33 = arith.constant 0 : index
    %c6 = arith.constant 6 : index
    %c0_34 = arith.constant 0 : index
    %119 = vector.load %arg4[%c0_33, %c6, %c0_34] : memref<2x8x128xf32, #tpu.memory_space<vmem>>, vector<2x1x128xf32>
    %120 = vector.shape_cast %119 : vector<2x1x128xf32> to vector<2x128xf32>
    %cst_35 = arith.constant dense<0.000000e+00> : vector<2x128xf32>
    %121 = tpu.matmul %118, %1, %cst_35 {dimension_numbers = #tpu.dot_dimension_numbers<[1], [0], [0], [1], [0, 0, 1, 1], [], []>} : vector<2x32xf32>, vector<32x128xf32>, vector<2x128xf32> -> vector<2x128xf32>
    %122 = arith.addf %120, %121 : vector<2x128xf32>
    %123 = arith.negf %122 : vector<2x128xf32>
    %124 = math.exp %123 : vector<2x128xf32>
    %cst_36 = arith.constant 1.000000e+00 : f32
    %125 = vector.broadcast %cst_36 : f32 to vector<2x128xf32>
    %126 = arith.addf %125, %124 : vector<2x128xf32>
    %127 = arith.divf %125, %126 : vector<2x128xf32>
    %128 = math.tanh %122 : vector<2x128xf32>
    %129 = vector.extract_strided_slice %127 {offsets = [0, 0], sizes = [2, 32], strides = [1, 1]} : vector<2x128xf32> to vector<2x32xf32>
    %130 = vector.extract_strided_slice %127 {offsets = [0, 32], sizes = [2, 32], strides = [1, 1]} : vector<2x128xf32> to vector<2x32xf32>
    %131 = vector.extract_strided_slice %128 {offsets = [0, 64], sizes = [2, 32], strides = [1, 1]} : vector<2x128xf32> to vector<2x32xf32>
    %132 = vector.extract_strided_slice %127 {offsets = [0, 96], sizes = [2, 32], strides = [1, 1]} : vector<2x128xf32> to vector<2x32xf32>
    %133 = arith.mulf %130, %116 : vector<2x32xf32>
    %134 = arith.mulf %129, %131 : vector<2x32xf32>
    %135 = arith.addf %133, %134 : vector<2x32xf32>
    %136 = math.tanh %135 : vector<2x32xf32>
    %137 = arith.mulf %132, %136 : vector<2x32xf32>
    %c0_37 = arith.constant 0 : index
    %c7 = arith.constant 7 : index
    %c0_38 = arith.constant 0 : index
    %138 = vector.load %arg4[%c0_37, %c7, %c0_38] : memref<2x8x128xf32, #tpu.memory_space<vmem>>, vector<2x1x128xf32>
    %139 = vector.shape_cast %138 : vector<2x1x128xf32> to vector<2x128xf32>
    %cst_39 = arith.constant dense<0.000000e+00> : vector<2x128xf32>
    %140 = tpu.matmul %137, %1, %cst_39 {dimension_numbers = #tpu.dot_dimension_numbers<[1], [0], [0], [1], [0, 0, 1, 1], [], []>} : vector<2x32xf32>, vector<32x128xf32>, vector<2x128xf32> -> vector<2x128xf32>
    %141 = arith.addf %139, %140 : vector<2x128xf32>
    %142 = arith.negf %141 : vector<2x128xf32>
    %143 = math.exp %142 : vector<2x128xf32>
    %cst_40 = arith.constant 1.000000e+00 : f32
    %144 = vector.broadcast %cst_40 : f32 to vector<2x128xf32>
    %145 = arith.addf %144, %143 : vector<2x128xf32>
    %146 = arith.divf %144, %145 : vector<2x128xf32>
    %147 = math.tanh %141 : vector<2x128xf32>
    %148 = vector.extract_strided_slice %146 {offsets = [0, 0], sizes = [2, 32], strides = [1, 1]} : vector<2x128xf32> to vector<2x32xf32>
    %149 = vector.extract_strided_slice %146 {offsets = [0, 32], sizes = [2, 32], strides = [1, 1]} : vector<2x128xf32> to vector<2x32xf32>
    %150 = vector.extract_strided_slice %147 {offsets = [0, 64], sizes = [2, 32], strides = [1, 1]} : vector<2x128xf32> to vector<2x32xf32>
    %151 = vector.extract_strided_slice %146 {offsets = [0, 96], sizes = [2, 32], strides = [1, 1]} : vector<2x128xf32> to vector<2x32xf32>
    %152 = arith.mulf %149, %135 : vector<2x32xf32>
    %153 = arith.mulf %148, %150 : vector<2x32xf32>
    %154 = arith.addf %152, %153 : vector<2x32xf32>
    %155 = math.tanh %154 : vector<2x32xf32>
    %156 = arith.mulf %151, %155 : vector<2x32xf32>
    %c0_41 = arith.constant 0 : index
    %c0_42 = arith.constant 0 : index
    %157 = vector.load %arg2[%c0_41, %c0_42] : memref<65x2xf32, #tpu.memory_space<vmem>>, vector<32x2xf32>
    %c32 = arith.constant 32 : index
    %c0_43 = arith.constant 0 : index
    %158 = vector.load %arg2[%c32, %c0_43] : memref<65x2xf32, #tpu.memory_space<vmem>>, vector<32x2xf32>
    %c64 = arith.constant 64 : index
    %c0_44 = arith.constant 0 : index
    %159 = vector.load %arg2[%c64, %c0_44] : memref<65x2xf32, #tpu.memory_space<vmem>>, vector<1x2xf32>
    %cst_45 = arith.constant dense<0.000000e+00> : vector<2x2xf32>
    %160 = tpu.matmul %23, %157, %cst_45 {dimension_numbers = #tpu.dot_dimension_numbers<[1], [0], [0], [1], [0, 0, 1, 1], [], []>} : vector<2x32xf32>, vector<32x2xf32>, vector<2x2xf32> -> vector<2x2xf32>
    %cst_46 = arith.constant dense<0.000000e+00> : vector<2x2xf32>
    %161 = tpu.matmul %156, %158, %cst_46 {dimension_numbers = #tpu.dot_dimension_numbers<[1], [0], [0], [1], [0, 0, 1, 1], [], []>} : vector<2x32xf32>, vector<32x2xf32>, vector<2x2xf32> -> vector<2x2xf32>
    %162 = arith.addf %160, %161 : vector<2x2xf32>
    %163 = vector.broadcast %159 : vector<1x2xf32> to vector<2x2xf32>
    %164 = arith.addf %162, %163 : vector<2x2xf32>
    %c0_47 = arith.constant 0 : index
    %c0_48 = arith.constant 0 : index
    %165 = vector.load %arg3[%c0_47, %c0_48] : memref<2x2xf32, #tpu.memory_space<vmem>>, vector<2x2xf32>
    tpu.vector_store %arg3[%c0_47, %c0_48], %164 {strides = array<i32>} : memref<2x2xf32, #tpu.memory_space<vmem>>, vector<2x2xf32>,
    return
  }
}

</mosaic_0001>

<llo_original>
// kernel: tpu_custom_call.1
$region0: #{tpu_custom_call.1}
  #allocation0 [shape = 'u32[]', space=smem, size = 0x4, offset = 0x4, fixed_abs, tag = 'smem constant byte address 0x4 - core index']
  #allocation1 [shape = 'u32[144,128]{1,0:T(1,128)}', space=vmem, size = 0x12000, scoped, tag = 'internal scratch']
  #allocation2 [shape = 'f32[2,8,128]{2,1,0:T(8,128)}', space=vmem, size = 0x2000, scoped, tag = 'scratch operand']
  %s0 = inlined_call_operand.vmem [shape: f32[2,8,50], index: 0, kind: input, shape index: {}]
  %s1 = inlined_call_operand.hbm [shape: f32[96,128], index: 1, kind: input, shape index: {}]
  %s2 = inlined_call_operand.vmem [shape: f32[65,2], index: 2, kind: input, shape index: {}]
  %s3 = inlined_call_operand.hbm [shape: f32[2,2], index: 3, kind: output, shape index: {}]
  %s4 = sld [smem:[#allocation0]]
  $region26: #{tpu_custom_call.1} parent=0
    _
  %s6 = ssub.s32 1, %s4
  %s7 = scalar_select 0, %s6, %s4
  $region1: #{tpu_custom_call.1} parent=0
    #allocation3 [shape = 'u8[49152]{0}', space=vmem, size = 0xc000, scoped, tag = 'input window, operand 1, single buffered']
    #allocation4 [shape = 's32[1]{0}', space=sflag, size = 0x4, scoped, tag = 'scoped memory for tpu_custom_call.1']
    #allocation5 [shape = 's32[1]{0}', space=sflag, size = 0x4, scoped, tag = 'scoped memory for tpu_custom_call.1']
    #allocation6 [shape = 'u8[1024]{0}', space=vmem, size = 0x400, scoped, tag = 'output window, operand 0, single buffered']
    %8 = vsyncpa [#allocation4], 0
    %9 = vsyncpa [#allocation5], 0
    // Predicated region
    $region2: #{tpu_custom_call.1} parent=1 // pred_check
      _
    $region3: #{tpu_custom_call.1} parent=1 // pred_check_branch
      %11 = sbr.rel (0) target = $region5
    $region4: #{tpu_custom_call.1} parent=1 // pred_region
      _
    $region5: #{tpu_custom_call.1} parent=1 // pred_fallthru
      _
    // Predicated region
    $region6: #{tpu_custom_call.1} parent=1 // pred_check
      _
    $region7: #{tpu_custom_call.1} parent=1 // pred_check_branch
      %13 = sbr.rel (0) target = $region9
    $region8: #{tpu_custom_call.1} parent=1 // pred_region
      %s15 = ssub.s32 1536, 1536
      %16 = vsyncadd [#allocation4], %s15
      %s17 = sshll.u32 [#allocation3], 4
      %s18 = int_to_ptr.vmem [resolvable:$true] %s17
      %23 = dma.hbm_to_vmem [thread:$0]  %s1, 1536, %s18, [#allocation4], 128, 128, 8
    $region9: #{tpu_custom_call.1} parent=1 // pred_fallthru
      _
    // Predicated region
    $region10: #{tpu_custom_call.1} parent=1 // pred_check
      _
    $region11: #{tpu_custom_call.1} parent=1 // pred_check_branch
      %25 = sbr.rel (0) target = $region13
    $region12: #{tpu_custom_call.1} parent=1 // pred_region
      _
    $region13: #{tpu_custom_call.1} parent=1 // pred_fallthru
      _
    // Predicated region
    $region14: #{tpu_custom_call.1} parent=1 // pred_check
      _
    $region15: #{tpu_custom_call.1} parent=1 // pred_check_branch
      %27 = sbr.rel (0) target = $region17
    $region16: #{tpu_custom_call.1} parent=1 // pred_region
      %28 = dma.done [#allocation4], 1536
    $region17: #{tpu_custom_call.1} parent=1 // pred_fallthru
      _
    %v29 = vld [vmem:[#allocation3] sm:$0xff]
    %v30 = vld [vmem:[#allocation3 + $0x8] sm:$0xff]
    %v31 = vld [vmem:[#allocation3 + $0x10] sm:$0xff]
    %v32 = vld [vmem:[#allocation3 + $0x18] sm:$0xff]
    %v33 = vld [vmem:[#allocation3 + $0x20] sm:$0xff]
    %v34 = vld [vmem:[#allocation3 + $0x28] sm:$0xff]
    %v35 = vld [vmem:[#allocation3 + $0x30] sm:$0x3]
    %v36 = vld [vmem:[#allocation3 + $0x38] sm:$0xff]
    %v37 = vld [vmem:[#allocation3 + $0x40] sm:$0xff]
    %v38 = vld [vmem:[#allocation3 + $0x48] sm:$0xff]
    %v39 = vld [vmem:[#allocation3 + $0x50] sm:$0xff]
    %v40 = vld [vmem:[#allocation3 + $0x58] sm:$0x1]
    %v41 = vld [vmem:[%s0] sm:$0xff]
    %v42 = vld [vmem:[%s0 + $0x8] sm:$0xff]
    %v43 = vlaneseq
    %v44 = vshrl.u32 %v43, 7
    %v45 = vsub.s32 0, %v44
    %v46 = vrot.slane %v40, %v45
    %vm47 = vcmask 408576
    %v49 = vsel %vm47, %v41, 0
    %v52 = vsel %vm47, %v42, 0
    %vm54 = vcmask 1041408
    %v56 = vsel %vm54, %v35, 0
    %58 = vmatprep.subr.mxu0 0.0
    %59 = vmatpush1.msra.mxu0 %v29
    %60 = vmatprep.subr.mxu0 0.0
    %61 = vmatpush1.msra.mxu0 %v30
    %62 = vmatprep.subr.mxu0 0.0
    %63 = vmatpush1.msra.mxu0 %v31
    %64 = vmatprep.subr.mxu0 0.0
    %65 = vmatpush1.msra.mxu0 %v32
    %66 = vmatprep.subr.mxu0 0.0
    %67 = vmatpush1.msra.mxu0 %v33
    %68 = vmatprep.subr.mxu0 0.0
    %69 = vmatpush1.msra.mxu0 %v34
    %70 = vmatprep.subr.mxu0 0.0
    %71 = vmatpush1.msra.mxu0 %v56
    %72 = vmatprep.subr.mxu0 0.0
    %73 = vmatpush1.msra.mxu0 0.0
    %74 = vmatprep.subr.mxu0 0.0
    %75 = vmatpush1.msra.mxu0 0.0
    %76 = vmatprep.subr.mxu0 0.0
    %77 = vmatpush1.msra.mxu0 0.0
    %78 = vmatprep.subr.mxu0 0.0
    %79 = vmatpush1.msra.mxu0 0.0
    %80 = vmatprep.subr.mxu0 0.0
    %81 = vmatpush1.msra.mxu0 0.0
    %82 = vmatprep.subr.mxu0 0.0
    %83 = vmatpush1.msra.mxu0 0.0
    %84 = vmatprep.subr.mxu0 0.0
    %85 = vmatpush1.msra.mxu0 0.0
    %86 = vmatprep.subr.mxu0 0.0
    %87 = vmatpush1.msra.mxu0 0.0
    %88 = vmatprep.subr.mxu0 0.0
    %89 = vmatpush1.msra.mxu0 0.0
    %90 = vmatprep.subr.mxu0 0.0
    %91 = vmatpush1.msra.mxu0 0.0
    %92 = vmatprep.subr.mxu0 0.0
    %93 = vmatpush1.msra.mxu0 0.0
    %94 = vmatprep.subr.mxu0 0.0
    %95 = vmatpush1.msra.mxu0 0.0
    %96 = vmatprep.subr.mxu0 0.0
    %97 = vmatpush1.msra.mxu0 0.0
    %98 = vmatprep.subr.mxu0 0.0
    %99 = vmatpush1.msra.mxu0 0.0
    %100 = vmatprep.subr.mxu0 0.0
    %101 = vmatpush1.msra.mxu0 0.0
    %102 = vmatprep.subr.mxu0 0.0
    %103 = vmatpush1.msra.mxu0 0.0
    %104 = vmatprep.subr.mxu0 0.0
    %105 = vmatpush1.msra.mxu0 0.0
    %106 = vmatprep.subr.mxu0 0.0
    %107 = vmatpush1.msra.mxu0 0.0
    %108 = vmatprep.subr.mxu0 0.0
    %109 = vmatpush1.msra.mxu0 0.0
    %110 = vmatprep.subr.mxu0 0.0
    %111 = vmatpush1.msra.mxu0 0.0
    %112 = vmatprep.subr.mxu0 0.0
    %113 = vmatpush1.msra.mxu0 0.0
    %114 = vmatprep.subr.mxu0 0.0
    %115 = vmatpush1.msra.mxu0 0.0
    %116 = vmatprep.subr.mxu0 0.0
    %117 = vmatpush1.msra.mxu0 0.0
    %118 = vmatprep.subr.mxu0 0.0
    %119 = vmatpush1.msra.mxu0 0.0
    %120 = vmatprep.subr.mxu0 0.0
    %121 = vmatpush1.msra.mxu0 0.0
    %122 = vmatprep.mubr.f32.mxu0 0.0
    %123 = vmatmul.mubr.f32.gmra.mrb[0].mxu0 %v49
    %v124 = vpop.f32.mrb[0].mxu0
    %v125 = vadd.f32 %v46, %v124
    %v126 = vpop.f32.mrb[0].mxu0
    %127 = vmatprep.mubr.f32.mxu0 0.0
    %128 = vmatmul.mubr.f32.gmra.mrb[0].mxu0 %v52
    %v129 = vpop.f32.mrb[0].mxu0
    %v130 = vadd.f32 %v46, %v129
    %v131 = vpop.f32.mrb[0].mxu0
    %132 = vdwg.mxu0
    %133 = vst [vmem:[#allocation2] sm:$0xff] %v125
    %134 = vst [vmem:[#allocation2 + $0x8] sm:$0xff] %v130
    %v135 = vld [vmem:[#allocation2] sm:$0x1]
    %v136 = vld [vmem:[#allocation2 + $0x8] sm:$0x1]
    %v137 = vxor.u32 %v135, 2147483648
    %v138 = vxor.u32 %v136, 2147483648
    %v139 = vmul.f32 %v137, 1.442695
    %v140 = vpow.pop %v139
    %v141 = vmul.f32 %v138, 1.442695
    %v142 = vpow.pop %v141
    %v143 = vadd.f32 %v140, 1.0
    %v144 = vadd.f32 %v142, 1.0
    %v145 = vrcp.pop %v143
    %v146 = vmul.f32 1.0, %v145
    %v147 = vrcp.pop %v144
    %v148 = vmul.f32 1.0, %v147
    %v149 = vtanh.pop %v135
    %v150 = vtanh.pop %v136
    %153 = vrot.lane.b32.xlu0 %v149, 64
    %v154 = vpop.permute.xlu0 %153
    %155 = vrot.lane.b32.xlu0 %v150, 64
    %v156 = vpop.permute.xlu0 %155
    %v159 = vmul.f32 %v146, %v154
    %v160 = vmul.f32 %v148, %v156
    %v161 = vtanh.pop %v159
    %v162 = vtanh.pop %v160
    %165 = vrot.lane.b32.xlu0 %v161, 96
    %v166 = vpop.permute.xlu0 %165
    %167 = vrot.lane.b32.xlu0 %v162, 96
    %v168 = vpop.permute.xlu0 %167
    %v171 = vmul.f32 %v146, %v166
    %v172 = vmul.f32 %v148, %v168
    %v173 = vld [vmem:[#allocation2 + $0x1] sm:$0x1]
    %v174 = vld [vmem:[#allocation2 + $0x9] sm:$0x1]
    %v177 = vrot.slane %v172, 7
    %vm178 = vcmask 1041409
    %v179 = vsel %vm178, %v177, %v171
    %180 = vrot.lane.b32.xlu0 %v179, 32
    %v181 = vpop.permute.xlu0 %180
    %vm182 = vcmask 261120
    %v183 = vsel %vm182, %v181, 0
    %185 = vmatprep.subr.mxu0 0.0
    %186 = vmatpush1.msra.mxu0 %v36
    %187 = vmatprep.subr.mxu0 0.0
    %188 = vmatpush1.msra.mxu0 %v37
    %189 = vmatprep.subr.mxu0 0.0
    %190 = vmatpush1.msra.mxu0 %v38
    %191 = vmatprep.subr.mxu0 0.0
    %192 = vmatpush1.msra.mxu0 %v39
    %193 = vmatprep.subr.mxu0 0.0
    %194 = vmatpush1.msra.mxu0 0.0
    %195 = vmatprep.subr.mxu0 0.0
    %196 = vmatpush1.msra.mxu0 0.0
    %197 = vmatprep.subr.mxu0 0.0
    %198 = vmatpush1.msra.mxu0 0.0
    %199 = vmatprep.subr.mxu0 0.0
    %200 = vmatpush1.msra.mxu0 0.0
    %201 = vmatprep.subr.mxu0 0.0
    %202 = vmatpush1.msra.mxu0 0.0
    %203 = vmatprep.subr.mxu0 0.0
    %204 = vmatpush1.msra.mxu0 0.0
    %205 = vmatprep.subr.mxu0 0.0
    %206 = vmatpush1.msra.mxu0 0.0
    %207 = vmatprep.subr.mxu0 0.0
    %208 = vmatpush1.msra.mxu0 0.0
    %209 = vmatprep.subr.mxu0 0.0
    %210 = vmatpush1.msra.mxu0 0.0
    %211 = vmatprep.subr.mxu0 0.0
    %212 = vmatpush1.msra.mxu0 0.0
    %213 = vmatprep.subr.mxu0 0.0
    %214 = vmatpush1.msra.mxu0 0.0
    %215 = vmatprep.subr.mxu0 0.0
    %216 = vmatpush1.msra.mxu0 0.0
    %217 = vmatprep.subr.mxu0 0.0
    %218 = vmatpush1.msra.mxu0 0.0
    %219 = vmatprep.subr.mxu0 0.0
    %220 = vmatpush1.msra.mxu0 0.0
    %221 = vmatprep.subr.mxu0 0.0
    %222 = vmatpush1.msra.mxu0 0.0
    %223 = vmatprep.subr.mxu0 0.0
    %224 = vmatpush1.msra.mxu0 0.0
    %225 = vmatprep.subr.mxu0 0.0
    %226 = vmatpush1.msra.mxu0 0.0
    %227 = vmatprep.subr.mxu0 0.0
    %228 = vmatpush1.msra.mxu0 0.0
    %229 = vmatprep.subr.mxu0 0.0
    %230 = vmatpush1.msra.mxu0 0.0
    %231 = vmatprep.subr.mxu0 0.0
    %232 = vmatpush1.msra.mxu0 0.0
    %233 = vmatprep.subr.mxu0 0.0
    %234 = vmatpush1.msra.mxu0 0.0
    %235 = vmatprep.subr.mxu0 0.0
    %236 = vmatpush1.msra.mxu0 0.0
    %237 = vmatprep.subr.mxu0 0.0
    %238 = vmatpush1.msra.mxu0 0.0
    %239 = vmatprep.subr.mxu0 0.0
    %240 = vmatpush1.msra.mxu0 0.0
    %241 = vmatprep.subr.mxu0 0.0
    %242 = vmatpush1.msra.mxu0 0.0
    %243 = vmatprep.subr.mxu0 0.0
    %244 = vmatpush1.msra.mxu0 0.0
    %245 = vmatprep.subr.mxu0 0.0
    %246 = vmatpush1.msra.mxu0 0.0
    %247 = vmatprep.subr.mxu0 0.0
    %248 = vmatpush1.msra.mxu0 0.0
    %249 = vmatprep.mubr.f32.mxu0 0.0
    %250 = vmatmul.mubr.f32.gmra.mrb[0].mxu0 %v183
    %v251 = vpop.f32.mrb[0].mxu0
    %v252 = vadd.f32 0.0, %v251
    %v253 = vpop.f32.mrb[0].mxu0
    %254 = vdwg.mxu0
    %v256 = vrot.slane %v252, 1
    %v259 = vadd.f32 %v173, %v252
    %v260 = vadd.f32 %v174, %v256
    %v261 = vxor.u32 %v259, 2147483648
    %v262 = vxor.u32 %v260, 2147483648
    %v263 = vmul.f32 %v261, 1.442695
    %v264 = vpow.pop %v263
    %v265 = vmul.f32 %v262, 1.442695
    %v266 = vpow.pop %v265
    %v267 = vadd.f32 %v264, 1.0
    %v268 = vadd.f32 %v266, 1.0
    %v269 = vrcp.pop %v267
    %v270 = vmul.f32 1.0, %v269
    %v271 = vrcp.pop %v268
    %v272 = vmul.f32 1.0, %v271
    %v273 = vtanh.pop %v259
    %v274 = vtanh.pop %v260
    %277 = vrot.lane.b32.xlu0 %v159, 32
    %v278 = vpop.permute.xlu0 %277
    %279 = vrot.lane.b32.xlu0 %v160, 32
    %v280 = vpop.permute.xlu0 %279
    %v283 = vmul.f32 %v270, %v278
    %v284 = vmul.f32 %v272, %v280
    %287 = vrot.lane.b32.xlu0 %v273, 64
    %v288 = vpop.permute.xlu0 %287
    %289 = vrot.lane.b32.xlu0 %v274, 64
    %v290 = vpop.permute.xlu0 %289
    %v293 = vmul.f32 %v270, %v288
    %v294 = vmul.f32 %v272, %v290
    %297 = vrot.lane.b32.xlu0 %v293, 32
    %v298 = vpop.permute.xlu0 %297
    %299 = vrot.lane.b32.xlu0 %v294, 32
    %v300 = vpop.permute.xlu0 %299
    %v303 = vadd.f32 %v283, %v298
    %v304 = vadd.f32 %v284, %v300
    %v305 = vtanh.pop %v303
    %v306 = vtanh.pop %v304
    %309 = vrot.lane.b32.xlu0 %v305, 64
    %v310 = vpop.permute.xlu0 %309
    %311 = vrot.lane.b32.xlu0 %v306, 64
    %v312 = vpop.permute.xlu0 %311
    %v315 = vmul.f32 %v270, %v310
    %v316 = vmul.f32 %v272, %v312
    %v317 = vld [vmem:[#allocation2 + $0x2] sm:$0x1]
    %v318 = vld [vmem:[#allocation2 + $0xa] sm:$0x1]
    %v321 = vrot.slane %v316, 7
    %v322 = vsel %vm178, %v321, %v315
    %323 = vrot.lane.b32.xlu0 %v322, 32
    %v324 = vpop.permute.xlu0 %323
    %v325 = vsel %vm182, %v324, 0
    %327 = vmatprep.subr.mxu0 0.0
    %328 = vmatpush1.msra.mxu0 %v36
    %329 = vmatprep.subr.mxu0 0.0
    %330 = vmatpush1.msra.mxu0 %v37
    %331 = vmatprep.subr.mxu0 0.0
    %332 = vmatpush1.msra.mxu0 %v38
    %333 = vmatprep.subr.mxu0 0.0
    %334 = vmatpush1.msra.mxu0 %v39
    %335 = vmatprep.subr.mxu0 0.0
    %336 = vmatpush1.msra.mxu0 0.0
    %337 = vmatprep.subr.mxu0 0.0
    %338 = vmatpush1.msra.mxu0 0.0
    %339 = vmatprep.subr.mxu0 0.0
    %340 = vmatpush1.msra.mxu0 0.0
    %341 = vmatprep.subr.mxu0 0.0
    %342 = vmatpush1.msra.mxu0 0.0
    %343 = vmatprep.subr.mxu0 0.0
    %344 = vmatpush1.msra.mxu0 0.0
    %345 = vmatprep.subr.mxu0 0.0
    %346 = vmatpush1.msra.mxu0 0.0
    %347 = vmatprep.subr.mxu0 0.0
    %348 = vmatpush1.msra.mxu0 0.0
    %349 = vmatprep.subr.mxu0 0.0
    %350 = vmatpush1.msra.mxu0 0.0
    %351 = vmatprep.subr.mxu0 0.0
    %352 = vmatpush1.msra.mxu0 0.0
    %353 = vmatprep.subr.mxu0 0.0
    %354 = vmatpush1.msra.mxu0 0.0
    %355 = vmatprep.subr.mxu0 0.0
    %356 = vmatpush1.msra.mxu0 0.0
    %357 = vmatprep.subr.mxu0 0.0
    %358 = vmatpush1.msra.mxu0 0.0
    %359 = vmatprep.subr.mxu0 0.0
    %360 = vmatpush1.msra.mxu0 0.0
    %361 = vmatprep.subr.mxu0 0.0
    %362 = vmatpush1.msra.mxu0 0.0
    %363 = vmatprep.subr.mxu0 0.0
    %364 = vmatpush1.msra.mxu0 0.0
    %365 = vmatprep.subr.mxu0 0.0
    %366 = vmatpush1.msra.mxu0 0.0
    %367 = vmatprep.subr.mxu0 0.0
    %368 = vmatpush1.msra.mxu0 0.0
    %369 = vmatprep.subr.mxu0 0.0
    %370 = vmatpush1.msra.mxu0 0.0
    %371 = vmatprep.subr.mxu0 0.0
    %372 = vmatpush1.msra.mxu0 0.0
    %373 = vmatprep.subr.mxu0 0.0
    %374 = vmatpush1.msra.mxu0 0.0
    %375 = vmatprep.subr.mxu0 0.0
    %376 = vmatpush1.msra.mxu0 0.0
    %377 = vmatprep.subr.mxu0 0.0
    %378 = vmatpush1.msra.mxu0 0.0
    %379 = vmatprep.subr.mxu0 0.0
    %380 = vmatpush1.msra.mxu0 0.0
    %381 = vmatprep.subr.mxu0 0.0
    %382 = vmatpush1.msra.mxu0 0.0
    %383 = vmatprep.subr.mxu0 0.0
    %384 = vmatpush1.msra.mxu0 0.0
    %385 = vmatprep.subr.mxu0 0.0
    %386 = vmatpush1.msra.mxu0 0.0
    %387 = vmatprep.subr.mxu0 0.0
    %388 = vmatpush1.msra.mxu0 0.0
    %389 = vmatprep.subr.mxu0 0.0
    %390 = vmatpush1.msra.mxu0 0.0
    %391 = vmatprep.mubr.f32.mxu0 0.0
    %392 = vmatmul.mubr.f32.gmra.mrb[0].mxu0 %v325
    %v393 = vpop.f32.mrb[0].mxu0
    %v394 = vadd.f32 0.0, %v393
    %v395 = vpop.f32.mrb[0].mxu0
    %396 = vdwg.mxu0
    %v398 = vrot.slane %v394, 1
    %v401 = vadd.f32 %v317, %v394
    %v402 = vadd.f32 %v318, %v398
    %v403 = vxor.u32 %v401, 2147483648
    %v404 = vxor.u32 %v402, 2147483648
    %v405 = vmul.f32 %v403, 1.442695
    %v406 = vpow.pop %v405
    %v407 = vmul.f32 %v404, 1.442695
    %v408 = vpow.pop %v407
    %v409 = vadd.f32 %v406, 1.0
    %v410 = vadd.f32 %v408, 1.0
    %v411 = vrcp.pop %v409
    %v412 = vmul.f32 1.0, %v411
    %v413 = vrcp.pop %v410
    %v414 = vmul.f32 1.0, %v413
    %v415 = vtanh.pop %v401
    %v416 = vtanh.pop %v402
    %v417 = vmul.f32 %v412, %v303
    %v418 = vmul.f32 %v414, %v304
    %421 = vrot.lane.b32.xlu0 %v415, 64
    %v422 = vpop.permute.xlu0 %421
    %423 = vrot.lane.b32.xlu0 %v416, 64
    %v424 = vpop.permute.xlu0 %423
    %v427 = vmul.f32 %v412, %v422
    %v428 = vmul.f32 %v414, %v424
    %431 = vrot.lane.b32.xlu0 %v427, 32
    %v432 = vpop.permute.xlu0 %431
    %433 = vrot.lane.b32.xlu0 %v428, 32
    %v434 = vpop.permute.xlu0 %433
    %v437 = vadd.f32 %v417, %v432
    %v438 = vadd.f32 %v418, %v434
    %v439 = vtanh.pop %v437
    %v440 = vtanh.pop %v438
    %443 = vrot.lane.b32.xlu0 %v439, 64
    %v444 = vpop.permute.xlu0 %443
    %445 = vrot.lane.b32.xlu0 %v440, 64
    %v446 = vpop.permute.xlu0 %445
    %v449 = vmul.f32 %v412, %v444
    %v450 = vmul.f32 %v414, %v446
    %v451 = vld [vmem:[#allocation2 + $0x3] sm:$0x1]
    %v452 = vld [vmem:[#allocation2 + $0xb] sm:$0x1]
    %v455 = vrot.slane %v450, 7
    %v456 = vsel %vm178, %v455, %v449
    %457 = vrot.lane.b32.xlu0 %v456, 32
    %v458 = vpop.permute.xlu0 %457
    %v459 = vsel %vm182, %v458, 0
    %461 = vmatprep.subr.mxu0 0.0
    %462 = vmatpush1.msra.mxu0 %v36
    %463 = vmatprep.subr.mxu0 0.0
    %464 = vmatpush1.msra.mxu0 %v37
    %465 = vmatprep.subr.mxu0 0.0
    %466 = vmatpush1.msra.mxu0 %v38
    %467 = vmatprep.subr.mxu0 0.0
    %468 = vmatpush1.msra.mxu0 %v39
    %469 = vmatprep.subr.mxu0 0.0
    %470 = vmatpush1.msra.mxu0 0.0
    %471 = vmatprep.subr.mxu0 0.0
    %472 = vmatpush1.msra.mxu0 0.0
    %473 = vmatprep.subr.mxu0 0.0
    %474 = vmatpush1.msra.mxu0 0.0
    %475 = vmatprep.subr.mxu0 0.0
    %476 = vmatpush1.msra.mxu0 0.0
    %477 = vmatprep.subr.mxu0 0.0
    %478 = vmatpush1.msra.mxu0 0.0
    %479 = vmatprep.subr.mxu0 0.0
    %480 = vmatpush1.msra.mxu0 0.0
    %481 = vmatprep.subr.mxu0 0.0
    %482 = vmatpush1.msra.mxu0 0.0
    %483 = vmatprep.subr.mxu0 0.0
    %484 = vmatpush1.msra.mxu0 0.0
    %485 = vmatprep.subr.mxu0 0.0
    %486 = vmatpush1.msra.mxu0 0.0
    %487 = vmatprep.subr.mxu0 0.0
    %488 = vmatpush1.msra.mxu0 0.0
    %489 = vmatprep.subr.mxu0 0.0
    %490 = vmatpush1.msra.mxu0 0.0
    %491 = vmatprep.subr.mxu0 0.0
    %492 = vmatpush1.msra.mxu0 0.0
    %493 = vmatprep.subr.mxu0 0.0
    %494 = vmatpush1.msra.mxu0 0.0
    %495 = vmatprep.subr.mxu0 0.0
    %496 = vmatpush1.msra.mxu0 0.0
    %497 = vmatprep.subr.mxu0 0.0
    %498 = vmatpush1.msra.mxu0 0.0
    %499 = vmatprep.subr.mxu0 0.0
    %500 = vmatpush1.msra.mxu0 0.0
    %501 = vmatprep.subr.mxu0 0.0
    %502 = vmatpush1.msra.mxu0 0.0
    %503 = vmatprep.subr.mxu0 0.0
    %504 = vmatpush1.msra.mxu0 0.0
    %505 = vmatprep.subr.mxu0 0.0
    %506 = vmatpush1.msra.mxu0 0.0
    %507 = vmatprep.subr.mxu0 0.0
    %508 = vmatpush1.msra.mxu0 0.0
    %509 = vmatprep.subr.mxu0 0.0
    %510 = vmatpush1.msra.mxu0 0.0
    %511 = vmatprep.subr.mxu0 0.0
    %512 = vmatpush1.msra.mxu0 0.0
    %513 = vmatprep.subr.mxu0 0.0
    %514 = vmatpush1.msra.mxu0 0.0
    %515 = vmatprep.subr.mxu0 0.0
    %516 = vmatpush1.msra.mxu0 0.0
    %517 = vmatprep.subr.mxu0 0.0
    %518 = vmatpush1.msra.mxu0 0.0
    %519 = vmatprep.subr.mxu0 0.0
    %520 = vmatpush1.msra.mxu0 0.0
    %521 = vmatprep.subr.mxu0 0.0
    %522 = vmatpush1.msra.mxu0 0.0
    %523 = vmatprep.subr.mxu0 0.0
    %524 = vmatpush1.msra.mxu0 0.0
    %525 = vmatprep.mubr.f32.mxu0 0.0
    %526 = vmatmul.mubr.f32.gmra.mrb[0].mxu0 %v459
    %v527 = vpop.f32.mrb[0].mxu0
    %v528 = vadd.f32 0.0, %v527
    %v529 = vpop.f32.mrb[0].mxu0
    %530 = vdwg.mxu0
    %v532 = vrot.slane %v528, 1
    %v535 = vadd.f32 %v451, %v528
    %v536 = vadd.f32 %v452, %v532
    %v537 = vxor.u32 %v535, 2147483648
    %v538 = vxor.u32 %v536, 2147483648
    %v539 = vmul.f32 %v537, 1.442695
    %v540 = vpow.pop %v539
    %v541 = vmul.f32 %v538, 1.442695
    %v542 = vpow.pop %v541
    %v543 = vadd.f32 %v540, 1.0
    %v544 = vadd.f32 %v542, 1.0
    %v545 = vrcp.pop %v543
    %v546 = vmul.f32 1.0, %v545
    %v547 = vrcp.pop %v544
    %v548 = vmul.f32 1.0, %v547
    %v549 = vtanh.pop %v535
    %v550 = vtanh.pop %v536
    %v551 = vmul.f32 %v546, %v437
    %v552 = vmul.f32 %v548, %v438
    %555 = vrot.lane.b32.xlu0 %v549, 64
    %v556 = vpop.permute.xlu0 %555
    %557 = vrot.lane.b32.xlu0 %v550, 64
    %v558 = vpop.permute.xlu0 %557
    %v561 = vmul.f32 %v546, %v556
    %v562 = vmul.f32 %v548, %v558
    %565 = vrot.lane.b32.xlu0 %v561, 32
    %v566 = vpop.permute.xlu0 %565
    %567 = vrot.lane.b32.xlu0 %v562, 32
    %v568 = vpop.permute.xlu0 %567
    %v571 = vadd.f32 %v551, %v566
    %v572 = vadd.f32 %v552, %v568
    %v573 = vtanh.pop %v571
    %v574 = vtanh.pop %v572
    %577 = vrot.lane.b32.xlu0 %v573, 64
    %v578 = vpop.permute.xlu0 %577
    %579 = vrot.lane.b32.xlu0 %v574, 64
    %v580 = vpop.permute.xlu0 %579
    %v583 = vmul.f32 %v546, %v578
    %v584 = vmul.f32 %v548, %v580
    %v585 = vld [vmem:[#allocation2 + $0x4] sm:$0x1]
    %v586 = vld [vmem:[#allocation2 + $0xc] sm:$0x1]
    %v589 = vrot.slane %v584, 7
    %v590 = vsel %vm178, %v589, %v583
    %591 = vrot.lane.b32.xlu0 %v590, 32
    %v592 = vpop.permute.xlu0 %591
    %v593 = vsel %vm182, %v592, 0
    %595 = vmatprep.subr.mxu0 0.0
    %596 = vmatpush1.msra.mxu0 %v36
    %597 = vmatprep.subr.mxu0 0.0
    %598 = vmatpush1.msra.mxu0 %v37
    %599 = vmatprep.subr.mxu0 0.0
    %600 = vmatpush1.msra.mxu0 %v38
    %601 = vmatprep.subr.mxu0 0.0
    %602 = vmatpush1.msra.mxu0 %v39
    %603 = vmatprep.subr.mxu0 0.0
    %604 = vmatpush1.msra.mxu0 0.0
    %605 = vmatprep.subr.mxu0 0.0
    %606 = vmatpush1.msra.mxu0 0.0
    %607 = vmatprep.subr.mxu0 0.0
    %608 = vmatpush1.msra.mxu0 0.0
    %609 = vmatprep.subr.mxu0 0.0
    %610 = vmatpush1.msra.mxu0 0.0
    %611 = vmatprep.subr.mxu0 0.0
    %612 = vmatpush1.msra.mxu0 0.0
    %613 = vmatprep.subr.mxu0 0.0
    %614 = vmatpush1.msra.mxu0 0.0
    %615 = vmatprep.subr.mxu0 0.0
    %616 = vmatpush1.msra.mxu0 0.0
    %617 = vmatprep.subr.mxu0 0.0
    %618 = vmatpush1.msra.mxu0 0.0
    %619 = vmatprep.subr.mxu0 0.0
    %620 = vmatpush1.msra.mxu0 0.0
    %621 = vmatprep.subr.mxu0 0.0
    %622 = vmatpush1.msra.mxu0 0.0
    %623 = vmatprep.subr.mxu0 0.0
    %624 = vmatpush1.msra.mxu0 0.0
    %625 = vmatprep.subr.mxu0 0.0
    %626 = vmatpush1.msra.mxu0 0.0
    %627 = vmatprep.subr.mxu0 0.0
    %628 = vmatpush1.msra.mxu0 0.0
    %629 = vmatprep.subr.mxu0 0.0
    %630 = vmatpush1.msra.mxu0 0.0
    %631 = vmatprep.subr.mxu0 0.0
    %632 = vmatpush1.msra.mxu0 0.0
    %633 = vmatprep.subr.mxu0 0.0
    %634 = vmatpush1.msra.mxu0 0.0
    %635 = vmatprep.subr.mxu0 0.0
    %636 = vmatpush1.msra.mxu0 0.0
    %637 = vmatprep.subr.mxu0 0.0
    %638 = vmatpush1.msra.mxu0 0.0
    %639 = vmatprep.subr.mxu0 0.0
    %640 = vmatpush1.msra.mxu0 0.0
    %641 = vmatprep.subr.mxu0 0.0
    %642 = vmatpush1.msra.mxu0 0.0
    %643 = vmatprep.subr.mxu0 0.0
    %644 = vmatpush1.msra.mxu0 0.0
    %645 = vmatprep.subr.mxu0 0.0
    %646 = vmatpush1.msra.mxu0 0.0
    %647 = vmatprep.subr.mxu0 0.0
    %648 = vmatpush1.msra.mxu0 0.0
    %649 = vmatprep.subr.mxu0 0.0
    %650 = vmatpush1.msra.mxu0 0.0
    %651 = vmatprep.subr.mxu0 0.0
    %652 = vmatpush1.msra.mxu0 0.0
    %653 = vmatprep.subr.mxu0 0.0
    %654 = vmatpush1.msra.mxu0 0.0
    %655 = vmatprep.subr.mxu0 0.0
    %656 = vmatpush1.msra.mxu0 0.0
    %657 = vmatprep.subr.mxu0 0.0
    %658 = vmatpush1.msra.mxu0 0.0
    %659 = vmatprep.mubr.f32.mxu0 0.0
    %660 = vmatmul.mubr.f32.gmra.mrb[0].mxu0 %v593
    %v661 = vpop.f32.mrb[0].mxu0
    %v662 = vadd.f32 0.0, %v661
    %v663 = vpop.f32.mrb[0].mxu0
    %664 = vdwg.mxu0
    %v666 = vrot.slane %v662, 1
    %v669 = vadd.f32 %v585, %v662
    %v670 = vadd.f32 %v586, %v666
    %v671 = vxor.u32 %v669, 2147483648
    %v672 = vxor.u32 %v670, 2147483648
    %v673 = vmul.f32 %v671, 1.442695
    %v674 = vpow.pop %v673
    %v675 = vmul.f32 %v672, 1.442695
    %v676 = vpow.pop %v675
    %v677 = vadd.f32 %v674, 1.0
    %v678 = vadd.f32 %v676, 1.0
    %v679 = vrcp.pop %v677
    %v680 = vmul.f32 1.0, %v679
    %v681 = vrcp.pop %v678
    %v682 = vmul.f32 1.0, %v681
    %v683 = vtanh.pop %v669
    %v684 = vtanh.pop %v670
    %v685 = vmul.f32 %v680, %v571
    %v686 = vmul.f32 %v682, %v572
    %689 = vrot.lane.b32.xlu0 %v683, 64
    %v690 = vpop.permute.xlu0 %689
    %691 = vrot.lane.b32.xlu0 %v684, 64
    %v692 = vpop.permute.xlu0 %691
    %v695 = vmul.f32 %v680, %v690
    %v696 = vmul.f32 %v682, %v692
    %699 = vrot.lane.b32.xlu0 %v695, 32
    %v700 = vpop.permute.xlu0 %699
    %701 = vrot.lane.b32.xlu0 %v696, 32
    %v702 = vpop.permute.xlu0 %701
    %v705 = vadd.f32 %v685, %v700
    %v706 = vadd.f32 %v686, %v702
    %v707 = vtanh.pop %v705
    %v708 = vtanh.pop %v706
    %711 = vrot.lane.b32.xlu0 %v707, 64
    %v712 = vpop.permute.xlu0 %711
    %713 = vrot.lane.b32.xlu0 %v708, 64
    %v714 = vpop.permute.xlu0 %713
    %v717 = vmul.f32 %v680, %v712
    %v718 = vmul.f32 %v682, %v714
    %v719 = vld [vmem:[#allocation2 + $0x5] sm:$0x1]
    %v720 = vld [vmem:[#allocation2 + $0xd] sm:$0x1]
    %v723 = vrot.slane %v718, 7
    %v724 = vsel %vm178, %v723, %v717
    %725 = vrot.lane.b32.xlu0 %v724, 32
    %v726 = vpop.permute.xlu0 %725
    %v727 = vsel %vm182, %v726, 0
    %729 = vmatprep.subr.mxu0 0.0
    %730 = vmatpush1.msra.mxu0 %v36
    %731 = vmatprep.subr.mxu0 0.0
    %732 = vmatpush1.msra.mxu0 %v37
    %733 = vmatprep.subr.mxu0 0.0
    %734 = vmatpush1.msra.mxu0 %v38
    %735 = vmatprep.subr.mxu0 0.0
    %736 = vmatpush1.msra.mxu0 %v39
    %737 = vmatprep.subr.mxu0 0.0
    %738 = vmatpush1.msra.mxu0 0.0
    %739 = vmatprep.subr.mxu0 0.0
    %740 = vmatpush1.msra.mxu0 0.0
    %741 = vmatprep.subr.mxu0 0.0
    %742 = vmatpush1.msra.mxu0 0.0
    %743 = vmatprep.subr.mxu0 0.0
    %744 = vmatpush1.msra.mxu0 0.0
    %745 = vmatprep.subr.mxu0 0.0
    %746 = vmatpush1.msra.mxu0 0.0
    %747 = vmatprep.subr.mxu0 0.0
    %748 = vmatpush1.msra.mxu0 0.0
    %749 = vmatprep.subr.mxu0 0.0
    %750 = vmatpush1.msra.mxu0 0.0
    %751 = vmatprep.subr.mxu0 0.0
    %752 = vmatpush1.msra.mxu0 0.0
    %753 = vmatprep.subr.mxu0 0.0
    %754 = vmatpush1.msra.mxu0 0.0
    %755 = vmatprep.subr.mxu0 0.0
    %756 = vmatpush1.msra.mxu0 0.0
    %757 = vmatprep.subr.mxu0 0.0
    %758 = vmatpush1.msra.mxu0 0.0
    %759 = vmatprep.subr.mxu0 0.0
    %760 = vmatpush1.msra.mxu0 0.0
    %761 = vmatprep.subr.mxu0 0.0
    %762 = vmatpush1.msra.mxu0 0.0
    %763 = vmatprep.subr.mxu0 0.0
    %764 = vmatpush1.msra.mxu0 0.0
    %765 = vmatprep.subr.mxu0 0.0
    %766 = vmatpush1.msra.mxu0 0.0
    %767 = vmatprep.subr.mxu0 0.0
    %768 = vmatpush1.msra.mxu0 0.0
    %769 = vmatprep.subr.mxu0 0.0
    %770 = vmatpush1.msra.mxu0 0.0
    %771 = vmatprep.subr.mxu0 0.0
    %772 = vmatpush1.msra.mxu0 0.0
    %773 = vmatprep.subr.mxu0 0.0
    %774 = vmatpush1.msra.mxu0 0.0
    %775 = vmatprep.subr.mxu0 0.0
    %776 = vmatpush1.msra.mxu0 0.0
    %777 = vmatprep.subr.mxu0 0.0
    %778 = vmatpush1.msra.mxu0 0.0
    %779 = vmatprep.subr.mxu0 0.0
    %780 = vmatpush1.msra.mxu0 0.0
    %781 = vmatprep.subr.mxu0 0.0
    %782 = vmatpush1.msra.mxu0 0.0
    %783 = vmatprep.subr.mxu0 0.0
    %784 = vmatpush1.msra.mxu0 0.0
    %785 = vmatprep.subr.mxu0 0.0
    %786 = vmatpush1.msra.mxu0 0.0
    %787 = vmatprep.subr.mxu0 0.0
    %788 = vmatpush1.msra.mxu0 0.0
    %789 = vmatprep.subr.mxu0 0.0
    %790 = vmatpush1.msra.mxu0 0.0
    %791 = vmatprep.subr.mxu0 0.0
    %792 = vmatpush1.msra.mxu0 0.0
    %793 = vmatprep.mubr.f32.mxu0 0.0
    %794 = vmatmul.mubr.f32.gmra.mrb[0].mxu0 %v727
    %v795 = vpop.f32.mrb[0].mxu0
    %v796 = vadd.f32 0.0, %v795
    %v797 = vpop.f32.mrb[0].mxu0
    %798 = vdwg.mxu0
    %v800 = vrot.slane %v796, 1
    %v803 = vadd.f32 %v719, %v796
    %v804 = vadd.f32 %v720, %v800
    %v805 = vxor.u32 %v803, 2147483648
    %v806 = vxor.u32 %v804, 2147483648
    %v807 = vmul.f32 %v805, 1.442695
    %v808 = vpow.pop %v807
    %v809 = vmul.f32 %v806, 1.442695
    %v810 = vpow.pop %v809
    %v811 = vadd.f32 %v808, 1.0
    %v812 = vadd.f32 %v810, 1.0
    %v813 = vrcp.pop %v811
    %v814 = vmul.f32 1.0, %v813
    %v815 = vrcp.pop %v812
    %v816 = vmul.f32 1.0, %v815
    %v817 = vtanh.pop %v803
    %v818 = vtanh.pop %v804
    %v819 = vmul.f32 %v814, %v705
    %v820 = vmul.f32 %v816, %v706
    %823 = vrot.lane.b32.xlu0 %v817, 64
    %v824 = vpop.permute.xlu0 %823
    %825 = vrot.lane.b32.xlu0 %v818, 64
    %v826 = vpop.permute.xlu0 %825
    %v829 = vmul.f32 %v814, %v824
    %v830 = vmul.f32 %v816, %v826
    %833 = vrot.lane.b32.xlu0 %v829, 32
    %v834 = vpop.permute.xlu0 %833
    %835 = vrot.lane.b32.xlu0 %v830, 32
    %v836 = vpop.permute.xlu0 %835
    %v839 = vadd.f32 %v819, %v834
    %v840 = vadd.f32 %v820, %v836
    %v841 = vtanh.pop %v839
    %v842 = vtanh.pop %v840
    %845 = vrot.lane.b32.xlu0 %v841, 64
    %v846 = vpop.permute.xlu0 %845
    %847 = vrot.lane.b32.xlu0 %v842, 64
    %v848 = vpop.permute.xlu0 %847
    %v851 = vmul.f32 %v814, %v846
    %v852 = vmul.f32 %v816, %v848
    %v853 = vld [vmem:[#allocation2 + $0x6] sm:$0x1]
    %v854 = vld [vmem:[#allocation2 + $0xe] sm:$0x1]
    %v857 = vrot.slane %v852, 7
    %v858 = vsel %vm178, %v857, %v851
    %859 = vrot.lane.b32.xlu0 %v858, 32
    %v860 = vpop.permute.xlu0 %859
    %v861 = vsel %vm182, %v860, 0
    %863 = vmatprep.subr.mxu0 0.0
    %864 = vmatpush1.msra.mxu0 %v36
    %865 = vmatprep.subr.mxu0 0.0
    %866 = vmatpush1.msra.mxu0 %v37
    %867 = vmatprep.subr.mxu0 0.0
    %868 = vmatpush1.msra.mxu0 %v38
    %869 = vmatprep.subr.mxu0 0.0
    %870 = vmatpush1.msra.mxu0 %v39
    %871 = vmatprep.subr.mxu0 0.0
    %872 = vmatpush1.msra.mxu0 0.0
    %873 = vmatprep.subr.mxu0 0.0
    %874 = vmatpush1.msra.mxu0 0.0
    %875 = vmatprep.subr.mxu0 0.0
    %876 = vmatpush1.msra.mxu0 0.0
    %877 = vmatprep.subr.mxu0 0.0
    %878 = vmatpush1.msra.mxu0 0.0
    %879 = vmatprep.subr.mxu0 0.0
    %880 = vmatpush1.msra.mxu0 0.0
    %881 = vmatprep.subr.mxu0 0.0
    %882 = vmatpush1.msra.mxu0 0.0
    %883 = vmatprep.subr.mxu0 0.0
    %884 = vmatpush1.msra.mxu0 0.0
    %885 = vmatprep.subr.mxu0 0.0
    %886 = vmatpush1.msra.mxu0 0.0
    %887 = vmatprep.subr.mxu0 0.0
    %888 = vmatpush1.msra.mxu0 0.0
    %889 = vmatprep.subr.mxu0 0.0
    %890 = vmatpush1.msra.mxu0 0.0
    %891 = vmatprep.subr.mxu0 0.0
    %892 = vmatpush1.msra.mxu0 0.0
    %893 = vmatprep.subr.mxu0 0.0
    %894 = vmatpush1.msra.mxu0 0.0
    %895 = vmatprep.subr.mxu0 0.0
    %896 = vmatpush1.msra.mxu0 0.0
    %897 = vmatprep.subr.mxu0 0.0
    %898 = vmatpush1.msra.mxu0 0.0
    %899 = vmatprep.subr.mxu0 0.0
    %900 = vmatpush1.msra.mxu0 0.0
    %901 = vmatprep.subr.mxu0 0.0
    %902 = vmatpush1.msra.mxu0 0.0
    %903 = vmatprep.subr.mxu0 0.0
    %904 = vmatpush1.msra.mxu0 0.0
    %905 = vmatprep.subr.mxu0 0.0
    %906 = vmatpush1.msra.mxu0 0.0
    %907 = vmatprep.subr.mxu0 0.0
    %908 = vmatpush1.msra.mxu0 0.0
    %909 = vmatprep.subr.mxu0 0.0
    %910 = vmatpush1.msra.mxu0 0.0
    %911 = vmatprep.subr.mxu0 0.0
    %912 = vmatpush1.msra.mxu0 0.0
    %913 = vmatprep.subr.mxu0 0.0
    %914 = vmatpush1.msra.mxu0 0.0
    %915 = vmatprep.subr.mxu0 0.0
    %916 = vmatpush1.msra.mxu0 0.0
    %917 = vmatprep.subr.mxu0 0.0
    %918 = vmatpush1.msra.mxu0 0.0
    %919 = vmatprep.subr.mxu0 0.0
    %920 = vmatpush1.msra.mxu0 0.0
    %921 = vmatprep.subr.mxu0 0.0
    %922 = vmatpush1.msra.mxu0 0.0
    %923 = vmatprep.subr.mxu0 0.0
    %924 = vmatpush1.msra.mxu0 0.0
    %925 = vmatprep.subr.mxu0 0.0
    %926 = vmatpush1.msra.mxu0 0.0
    %927 = vmatprep.mubr.f32.mxu0 0.0
    %928 = vmatmul.mubr.f32.gmra.mrb[0].mxu0 %v861
    %v929 = vpop.f32.mrb[0].mxu0
    %v930 = vadd.f32 0.0, %v929
    %v931 = vpop.f32.mrb[0].mxu0
    %932 = vdwg.mxu0
    %v934 = vrot.slane %v930, 1
    %v937 = vadd.f32 %v853, %v930
    %v938 = vadd.f32 %v854, %v934
    %v939 = vxor.u32 %v937, 2147483648
    %v940 = vxor.u32 %v938, 2147483648
    %v941 = vmul.f32 %v939, 1.442695
    %v942 = vpow.pop %v941
    %v943 = vmul.f32 %v940, 1.442695
    %v944 = vpow.pop %v943
    %v945 = vadd.f32 %v942, 1.0
    %v946 = vadd.f32 %v944, 1.0
    %v947 = vrcp.pop %v945
    %v948 = vmul.f32 1.0, %v947
    %v949 = vrcp.pop %v946
    %v950 = vmul.f32 1.0, %v949
    %v951 = vtanh.pop %v937
    %v952 = vtanh.pop %v938
    %v953 = vmul.f32 %v948, %v839
    %v954 = vmul.f32 %v950, %v840
    %957 = vrot.lane.b32.xlu0 %v951, 64
    %v958 = vpop.permute.xlu0 %957
    %959 = vrot.lane.b32.xlu0 %v952, 64
    %v960 = vpop.permute.xlu0 %959
    %v963 = vmul.f32 %v948, %v958
    %v964 = vmul.f32 %v950, %v960
    %967 = vrot.lane.b32.xlu0 %v963, 32
    %v968 = vpop.permute.xlu0 %967
    %969 = vrot.lane.b32.xlu0 %v964, 32
    %v970 = vpop.permute.xlu0 %969
    %v973 = vadd.f32 %v953, %v968
    %v974 = vadd.f32 %v954, %v970
    %v975 = vtanh.pop %v973
    %v976 = vtanh.pop %v974
    %979 = vrot.lane.b32.xlu0 %v975, 64
    %v980 = vpop.permute.xlu0 %979
    %981 = vrot.lane.b32.xlu0 %v976, 64
    %v982 = vpop.permute.xlu0 %981
    %v985 = vmul.f32 %v948, %v980
    %v986 = vmul.f32 %v950, %v982
    %v987 = vld [vmem:[#allocation2 + $0x7] sm:$0x1]
    %v988 = vld [vmem:[#allocation2 + $0xf] sm:$0x1]
    %v991 = vrot.slane %v986, 7
    %v992 = vsel %vm178, %v991, %v985
    %993 = vrot.lane.b32.xlu0 %v992, 32
    %v994 = vpop.permute.xlu0 %993
    %v995 = vsel %vm182, %v994, 0
    %997 = vmatprep.subr.mxu0 0.0
    %998 = vmatpush1.msra.mxu0 %v36
    %999 = vmatprep.subr.mxu0 0.0
    %1000 = vmatpush1.msra.mxu0 %v37
    %1001 = vmatprep.subr.mxu0 0.0
    %1002 = vmatpush1.msra.mxu0 %v38
    %1003 = vmatprep.subr.mxu0 0.0
    %1004 = vmatpush1.msra.mxu0 %v39
    %1005 = vmatprep.subr.mxu0 0.0
    %1006 = vmatpush1.msra.mxu0 0.0
    %1007 = vmatprep.subr.mxu0 0.0
    %1008 = vmatpush1.msra.mxu0 0.0
    %1009 = vmatprep.subr.mxu0 0.0
    %1010 = vmatpush1.msra.mxu0 0.0
    %1011 = vmatprep.subr.mxu0 0.0
    %1012 = vmatpush1.msra.mxu0 0.0
    %1013 = vmatprep.subr.mxu0 0.0
    %1014 = vmatpush1.msra.mxu0 0.0
    %1015 = vmatprep.subr.mxu0 0.0
    %1016 = vmatpush1.msra.mxu0 0.0
    %1017 = vmatprep.subr.mxu0 0.0
    %1018 = vmatpush1.msra.mxu0 0.0
    %1019 = vmatprep.subr.mxu0 0.0
    %1020 = vmatpush1.msra.mxu0 0.0
    %1021 = vmatprep.subr.mxu0 0.0
    %1022 = vmatpush1.msra.mxu0 0.0
    %1023 = vmatprep.subr.mxu0 0.0
    %1024 = vmatpush1.msra.mxu0 0.0
    %1025 = vmatprep.subr.mxu0 0.0
    %1026 = vmatpush1.msra.mxu0 0.0
    %1027 = vmatprep.subr.mxu0 0.0
    %1028 = vmatpush1.msra.mxu0 0.0
    %1029 = vmatprep.subr.mxu0 0.0
    %1030 = vmatpush1.msra.mxu0 0.0
    %1031 = vmatprep.subr.mxu0 0.0
    %1032 = vmatpush1.msra.mxu0 0.0
    %1033 = vmatprep.subr.mxu0 0.0
    %1034 = vmatpush1.msra.mxu0 0.0
    %1035 = vmatprep.subr.mxu0 0.0
    %1036 = vmatpush1.msra.mxu0 0.0
    %1037 = vmatprep.subr.mxu0 0.0
    %1038 = vmatpush1.msra.mxu0 0.0
    %1039 = vmatprep.subr.mxu0 0.0
    %1040 = vmatpush1.msra.mxu0 0.0
    %1041 = vmatprep.subr.mxu0 0.0
    %1042 = vmatpush1.msra.mxu0 0.0
    %1043 = vmatprep.subr.mxu0 0.0
    %1044 = vmatpush1.msra.mxu0 0.0
    %1045 = vmatprep.subr.mxu0 0.0
    %1046 = vmatpush1.msra.mxu0 0.0
    %1047 = vmatprep.subr.mxu0 0.0
    %1048 = vmatpush1.msra.mxu0 0.0
    %1049 = vmatprep.subr.mxu0 0.0
    %1050 = vmatpush1.msra.mxu0 0.0
    %1051 = vmatprep.subr.mxu0 0.0
    %1052 = vmatpush1.msra.mxu0 0.0
    %1053 = vmatprep.subr.mxu0 0.0
    %1054 = vmatpush1.msra.mxu0 0.0
    %1055 = vmatprep.subr.mxu0 0.0
    %1056 = vmatpush1.msra.mxu0 0.0
    %1057 = vmatprep.subr.mxu0 0.0
    %1058 = vmatpush1.msra.mxu0 0.0
    %1059 = vmatprep.subr.mxu0 0.0
    %1060 = vmatpush1.msra.mxu0 0.0
    %1061 = vmatprep.mubr.f32.mxu0 0.0
    %1062 = vmatmul.mubr.f32.gmra.mrb[0].mxu0 %v995
    %v1063 = vpop.f32.mrb[0].mxu0
    %v1064 = vadd.f32 0.0, %v1063
    %v1065 = vpop.f32.mrb[0].mxu0
    %1066 = vdwg.mxu0
    %v1068 = vrot.slane %v1064, 1
    %v1071 = vadd.f32 %v987, %v1064
    %v1072 = vadd.f32 %v988, %v1068
    %v1073 = vxor.u32 %v1071, 2147483648
    %v1074 = vxor.u32 %v1072, 2147483648
    %v1075 = vmul.f32 %v1073, 1.442695
    %v1076 = vpow.pop %v1075
    %v1077 = vmul.f32 %v1074, 1.442695
    %v1078 = vpow.pop %v1077
    %v1079 = vadd.f32 %v1076, 1.0
    %v1080 = vadd.f32 %v1078, 1.0
    %v1081 = vrcp.pop %v1079
    %v1082 = vmul.f32 1.0, %v1081
    %v1083 = vrcp.pop %v1080
    %v1084 = vmul.f32 1.0, %v1083
    %v1085 = vtanh.pop %v1071
    %v1086 = vtanh.pop %v1072
    %v1087 = vmul.f32 %v1082, %v973
    %v1088 = vmul.f32 %v1084, %v974
    %1091 = vrot.lane.b32.xlu0 %v1085, 64
    %v1092 = vpop.permute.xlu0 %1091
    %1093 = vrot.lane.b32.xlu0 %v1086, 64
    %v1094 = vpop.permute.xlu0 %1093
    %v1097 = vmul.f32 %v1082, %v1092
    %v1098 = vmul.f32 %v1084, %v1094
    %1101 = vrot.lane.b32.xlu0 %v1097, 32
    %v1102 = vpop.permute.xlu0 %1101
    %1103 = vrot.lane.b32.xlu0 %v1098, 32
    %v1104 = vpop.permute.xlu0 %1103
    %v1107 = vadd.f32 %v1087, %v1102
    %v1108 = vadd.f32 %v1088, %v1104
    %v1109 = vtanh.pop %v1107
    %v1110 = vtanh.pop %v1108
    %1113 = vrot.lane.b32.xlu0 %v1109, 64
    %v1114 = vpop.permute.xlu0 %1113
    %1115 = vrot.lane.b32.xlu0 %v1110, 64
    %v1116 = vpop.permute.xlu0 %1115
    %v1119 = vmul.f32 %v1082, %v1114
    %v1120 = vmul.f32 %v1084, %v1116
    %v1121 = vld [vmem:[%s2] sm:$0xff]
    %v1122 = vld [vmem:[%s2 + $0x8] sm:$0xff]
    %v1123 = vld [vmem:[%s2 + $0x10] sm:$0xff]
    %v1124 = vld [vmem:[%s2 + $0x18] sm:$0xff]
    %v1125 = vld [vmem:[%s2 + $0x20] sm:$0xff]
    %v1126 = vld [vmem:[%s2 + $0x28] sm:$0xff]
    %v1127 = vld [vmem:[%s2 + $0x30] sm:$0xff]
    %v1128 = vld [vmem:[%s2 + $0x38] sm:$0xff]
    %v1129 = vld [vmem:[%s2 + $0x40] sm:$0x1]
    %v1132 = vrot.slane %v1120, 7
    %v1133 = vsel %vm178, %v1132, %v1119
    %1134 = vrot.lane.b32.xlu0 %v1133, 32
    %v1135 = vpop.permute.xlu0 %1134
    %v1136 = vsel %vm182, %v1135, 0
    %1138 = vmatprep.subr.mxu0 0.0
    %1139 = vmatpush1.msra.mxu0 %v1125
    %1140 = vmatprep.subr.mxu0 0.0
    %1141 = vmatpush1.msra.mxu0 %v1126
    %1142 = vmatprep.subr.mxu0 0.0
    %1143 = vmatpush1.msra.mxu0 %v1127
    %1144 = vmatprep.subr.mxu0 0.0
    %1145 = vmatpush1.msra.mxu0 %v1128
    %1146 = vmatprep.subr.mxu0 0.0
    %1147 = vmatpush1.msra.mxu0 0.0
    %1148 = vmatprep.subr.mxu0 0.0
    %1149 = vmatpush1.msra.mxu0 0.0
    %1150 = vmatprep.subr.mxu0 0.0
    %1151 = vmatpush1.msra.mxu0 0.0
    %1152 = vmatprep.subr.mxu0 0.0
    %1153 = vmatpush1.msra.mxu0 0.0
    %1154 = vmatprep.subr.mxu0 0.0
    %1155 = vmatpush1.msra.mxu0 0.0
    %1156 = vmatprep.subr.mxu0 0.0
    %1157 = vmatpush1.msra.mxu0 0.0
    %1158 = vmatprep.subr.mxu0 0.0
    %1159 = vmatpush1.msra.mxu0 0.0
    %1160 = vmatprep.subr.mxu0 0.0
    %1161 = vmatpush1.msra.mxu0 0.0
    %1162 = vmatprep.subr.mxu0 0.0
    %1163 = vmatpush1.msra.mxu0 0.0
    %1164 = vmatprep.subr.mxu0 0.0
    %1165 = vmatpush1.msra.mxu0 0.0
    %1166 = vmatprep.subr.mxu0 0.0
    %1167 = vmatpush1.msra.mxu0 0.0
    %1168 = vmatprep.subr.mxu0 0.0
    %1169 = vmatpush1.msra.mxu0 0.0
    %1170 = vmatprep.subr.mxu0 0.0
    %1171 = vmatpush1.msra.mxu0 0.0
    %1172 = vmatprep.subr.mxu0 0.0
    %1173 = vmatpush1.msra.mxu0 0.0
    %1174 = vmatprep.subr.mxu0 0.0
    %1175 = vmatpush1.msra.mxu0 0.0
    %1176 = vmatprep.subr.mxu0 0.0
    %1177 = vmatpush1.msra.mxu0 0.0
    %1178 = vmatprep.subr.mxu0 0.0
    %1179 = vmatpush1.msra.mxu0 0.0
    %1180 = vmatprep.subr.mxu0 0.0
    %1181 = vmatpush1.msra.mxu0 0.0
    %1182 = vmatprep.subr.mxu0 0.0
    %1183 = vmatpush1.msra.mxu0 0.0
    %1184 = vmatprep.subr.mxu0 0.0
    %1185 = vmatpush1.msra.mxu0 0.0
    %1186 = vmatprep.subr.mxu0 0.0
    %1187 = vmatpush1.msra.mxu0 0.0
    %1188 = vmatprep.subr.mxu0 0.0
    %1189 = vmatpush1.msra.mxu0 0.0
    %1190 = vmatprep.subr.mxu0 0.0
    %1191 = vmatpush1.msra.mxu0 0.0
    %1192 = vmatprep.subr.mxu0 0.0
    %1193 = vmatpush1.msra.mxu0 0.0
    %1194 = vmatprep.subr.mxu0 0.0
    %1195 = vmatpush1.msra.mxu0 0.0
    %1196 = vmatprep.subr.mxu0 0.0
    %1197 = vmatpush1.msra.mxu0 0.0
    %1198 = vmatprep.subr.mxu0 0.0
    %1199 = vmatpush1.msra.mxu0 0.0
    %1200 = vmatprep.subr.mxu0 0.0
    %1201 = vmatpush1.msra.mxu0 0.0
    %1202 = vmatprep.mubr.f32.mxu0 0.0
    %1203 = vmatmul.mubr.f32.gmra.mrb[0].mxu0 %v1136
    %v1204 = vpop.f32.mrb[0].mxu0
    %v1205 = vadd.f32 0.0, %v1204
    %v1206 = vpop.f32.mrb[0].mxu0
    %1207 = vdwg.mxu0
    %1208 = vmatprep.subr.mxu0 0.0
    %1209 = vmatpush1.msra.mxu0 %v1121
    %1210 = vmatprep.subr.mxu0 0.0
    %1211 = vmatpush1.msra.mxu0 %v1122
    %1212 = vmatprep.subr.mxu0 0.0
    %1213 = vmatpush1.msra.mxu0 %v1123
    %1214 = vmatprep.subr.mxu0 0.0
    %1215 = vmatpush1.msra.mxu0 %v1124
    %1216 = vmatprep.subr.mxu0 0.0
    %1217 = vmatpush1.msra.mxu0 0.0
    %1218 = vmatprep.subr.mxu0 0.0
    %1219 = vmatpush1.msra.mxu0 0.0
    %1220 = vmatprep.subr.mxu0 0.0
    %1221 = vmatpush1.msra.mxu0 0.0
    %1222 = vmatprep.subr.mxu0 0.0
    %1223 = vmatpush1.msra.mxu0 0.0
    %1224 = vmatprep.subr.mxu0 0.0
    %1225 = vmatpush1.msra.mxu0 0.0
    %1226 = vmatprep.subr.mxu0 0.0
    %1227 = vmatpush1.msra.mxu0 0.0
    %1228 = vmatprep.subr.mxu0 0.0
    %1229 = vmatpush1.msra.mxu0 0.0
    %1230 = vmatprep.subr.mxu0 0.0
    %1231 = vmatpush1.msra.mxu0 0.0
    %1232 = vmatprep.subr.mxu0 0.0
    %1233 = vmatpush1.msra.mxu0 0.0
    %1234 = vmatprep.subr.mxu0 0.0
    %1235 = vmatpush1.msra.mxu0 0.0
    %1236 = vmatprep.subr.mxu0 0.0
    %1237 = vmatpush1.msra.mxu0 0.0
    %1238 = vmatprep.subr.mxu0 0.0
    %1239 = vmatpush1.msra.mxu0 0.0
    %1240 = vmatprep.subr.mxu0 0.0
    %1241 = vmatpush1.msra.mxu0 0.0
    %1242 = vmatprep.subr.mxu0 0.0
    %1243 = vmatpush1.msra.mxu0 0.0
    %1244 = vmatprep.subr.mxu0 0.0
    %1245 = vmatpush1.msra.mxu0 0.0
    %1246 = vmatprep.subr.mxu0 0.0
    %1247 = vmatpush1.msra.mxu0 0.0
    %1248 = vmatprep.subr.mxu0 0.0
    %1249 = vmatpush1.msra.mxu0 0.0
    %1250 = vmatprep.subr.mxu0 0.0
    %1251 = vmatpush1.msra.mxu0 0.0
    %1252 = vmatprep.subr.mxu0 0.0
    %1253 = vmatpush1.msra.mxu0 0.0
    %1254 = vmatprep.subr.mxu0 0.0
    %1255 = vmatpush1.msra.mxu0 0.0
    %1256 = vmatprep.subr.mxu0 0.0
    %1257 = vmatpush1.msra.mxu0 0.0
    %1258 = vmatprep.subr.mxu0 0.0
    %1259 = vmatpush1.msra.mxu0 0.0
    %1260 = vmatprep.subr.mxu0 0.0
    %1261 = vmatpush1.msra.mxu0 0.0
    %1262 = vmatprep.subr.mxu0 0.0
    %1263 = vmatpush1.msra.mxu0 0.0
    %1264 = vmatprep.subr.mxu0 0.0
    %1265 = vmatpush1.msra.mxu0 0.0
    %1266 = vmatprep.subr.mxu0 0.0
    %1267 = vmatpush1.msra.mxu0 0.0
    %1268 = vmatprep.subr.mxu0 0.0
    %1269 = vmatpush1.msra.mxu0 0.0
    %1270 = vmatprep.subr.mxu0 0.0
    %1271 = vmatpush1.msra.mxu0 0.0
    %1272 = vmatprep.mubr.f32.mxu0 0.0
    %1273 = vmatmul.mubr.f32.gmra.mrb[0].mxu0 %v183
    %v1274 = vpop.f32.mrb[0].mxu0
    %v1275 = vadd.f32 %v1205, %v1274
    %v1276 = vpop.f32.mrb[0].mxu0
    %1277 = vdwg.mxu0
    %v1278 = vlaneseq
    %v1279 = vshrl.u32 %v1278, 7
    %v1280 = vsub.s32 0, %v1279
    %v1281 = vrot.slane %v1129, %v1280
    %v1282 = vadd.f32 %v1275, %v1281
    %vm1283 = vcmask 9216
    %1284 = vst.msk [vmem:[#allocation6] sm:$0x3] %vm1283, %v1282
    // Predicated region
    $region18: #{tpu_custom_call.1} parent=1 // pred_check
      _
    $region19: #{tpu_custom_call.1} parent=1 // pred_check_branch
      %1286 = sbr.rel (0) target = $region21
    $region20: #{tpu_custom_call.1} parent=1 // pred_region
      %s1288 = ssub.s32 32, 32
      %1289 = vsyncadd [#allocation5], %s1288
      %s1291 = sshll.u32 [#allocation6], 4
      %s1292 = int_to_ptr.vmem [resolvable:$true] %s1291
      %1294 = dma.vmem_to_hbm [thread:$0]  %s1292, 32, %s3, [#allocation5]
    $region21: #{tpu_custom_call.1} parent=1 // pred_fallthru
      _
    // Predicated region
    $region22: #{tpu_custom_call.1} parent=1 // pred_check
      _
    $region23: #{tpu_custom_call.1} parent=1 // pred_check_branch
      %1296 = sbr.rel (0) target = $region25
    $region24: #{tpu_custom_call.1} parent=1 // pred_region
      %1297 = dma.done [#allocation5], 32
    $region25: #{tpu_custom_call.1} parent=1 // pred_fallthru
      _
    %1298 = vsyncpa [#allocation4], 1
    %1299 = vsyncpa [#allocation5], 1

</llo_original>
